<compile_context>
chip_gen: v7x
topology: tpu7x:2x2x1
jax: 0.10.0
libtpu: 0.0.40
codegen_flags: <defaults>
</compile_context>

<pallas_src>
import jax
import jax.numpy as jnp
from jax.experimental import pallas as pl
from jax.experimental.pallas import tpu as pltpu


def _round_up(a: int, b: int) -> int:
    return (a + b - 1) // b * b


def _dropout2d_kernel(mask_ref, x_ref, o_ref):
    # mask_ref: (tile_nc, 1) already scaled by 1/(1-p); x_ref: (tile_nc, tile_hw)
    o_ref[...] = (x_ref[...] * mask_ref[...]).astype(o_ref.dtype)


def dropout2d_apply(x_nchw, mask_nc11, p):
    """Apply the persistent Dropout2d mask: mask * x / (1 - p)."""
    N, C, H, W = x_nchw.shape
    NC, HW = N * C, H * W
    dtype = x_nchw.dtype
    itemsize = jnp.dtype(dtype).itemsize
    inv_keep = float(1.0 / (1.0 - p))

    # Sublane packing multiple: 8 for f32, 16 for bf16, 32 for int8.
    sublane = 8 * max(1, 4 // itemsize)

    # Lane tile: multiple of 128, capped at 1024 (fits v5e's 16 MiB default
    # scoped VMEM with double buffering); row tile: multiple of `sublane`,
    # capped at 512.
    hw128 = _round_up(HW, 128)
    lane_tile = min(1024, hw128)
    HW_pad = _round_up(HW, lane_tile)

    row_tile = min(512, _round_up(NC, sublane))
    NC_pad = _round_up(NC, row_tile)

    # Flatten to a lane-dense slab and pad to tile multiples.
    x2d = x_nchw.reshape(NC, HW)
    if NC_pad != NC or HW_pad != HW:
        x2d = jnp.pad(x2d, ((0, NC_pad - NC), (0, HW_pad - HW)))

    # Fold inv_keep into the tiny per-(N,C) mask and match x's dtype so the
    # kernel multiply stays in the native width (bf16 on v6e/v7x).
    mask2d = (mask_nc11.reshape(NC, 1).astype(jnp.float32) * inv_keep).astype(dtype)
    if NC_pad != NC:
        mask2d = jnp.pad(mask2d, ((0, NC_pad - NC), (0, 0)))

    grid = (NC_pad // row_tile, HW_pad // lane_tile)

    # Explicit VMEM budget: double-buffered x block + out block + mask block.
    block_bytes = row_tile * lane_tile * itemsize
    mask_bytes = row_tile * itemsize
    needed = 2 * (2 * block_bytes + mask_bytes)
    vmem_limit = min(64 << 20, max(2 * needed, 8 << 20))

    out2d = pl.pallas_call(
        _dropout2d_kernel,
        out_shape=jax.ShapeDtypeStruct((NC_pad, HW_pad), dtype),
        grid=grid,
        in_specs=[
            pl.BlockSpec((row_tile, 1), lambda i, j: (i, 0)),          # mask
            pl.BlockSpec((row_tile, lane_tile), lambda i, j: (i, j)),  # x
        ],
        out_specs=pl.BlockSpec((row_tile, lane_tile), lambda i, j: (i, j)),
        compiler_params=pltpu.CompilerParams(
            dimension_semantics=("parallel", "parallel"),
            vmem_limit_bytes=vmem_limit,
        ),
    )(mask2d, x2d)

    if NC_pad != NC or HW_pad != HW:
        out2d = out2d[:NC, :HW]
    return out2d.reshape(N, C, H, W)


class Dropout2d:
    """Stateful spiking Dropout2d: mask is frozen between reset() calls."""

    def __init__(self, p=0.2, seed=0):
        assert 0 < p < 1
        self.p = p
        self.mask = None
        self.training = True
        self._key = jax.random.PRNGKey(seed)

    def forward(self, x):
        if self.training:
            if self.mask is None:
                # Mask is generated once per "simulation round" (glue, not hot path).
                self._key, sub = jax.random.split(self._key)
                u = jax.random.uniform(sub, (x.shape[0], x.shape[1], 1, 1),
                                       dtype=jnp.float32)
                self.mask = (u > self.p).astype(jnp.float32)
            return dropout2d_apply(x, self.mask, self.p)
        else:
            return x

    __call__ = forward

    def reset(self):
        self.mask = None


if __name__ == "__main__":
    key = jax.random.PRNGKey(0)
    N, C, H, W = 2, 4, 16, 16
    x = jax.random.normal(key, (N, C, H, W), dtype=jnp.float32)

    layer = Dropout2d(p=0.2, seed=0)

    # First forward: generates and applies the mask.
    y1 = jax.block_until_ready(layer(x))

    # Second forward: same mask is reused (stateful behavior).
    y2 = jax.block_until_ready(layer(x))

    # Reference check against pure-JAX computation.
    ref = layer.mask * x / (1.0 - layer.p)
    assert jnp.allclose(y1, ref, atol=1e-6, rtol=1e-6)
    assert jnp.allclose(y2, ref, atol=1e-6, rtol=1e-6)

    # Non-tile-aligned shape (exercises the padding path: HW=15*15=225, NC=6).
    x_odd = jax.random.normal(jax.random.PRNGKey(1), (2, 3, 15, 15), jnp.float32)
    layer_odd = Dropout2d(p=0.3, seed=1)
    y_odd = jax.block_until_ready(layer_odd(x_odd))
    ref_odd = layer_odd.mask * x_odd / (1.0 - layer_odd.p)
    assert jnp.allclose(y_odd, ref_odd, atol=1e-6, rtol=1e-6)

    # Eval mode: identity.
    layer.training = False
    y3 = jax.block_until_ready(layer(x))
    assert jnp.allclose(y3, x)

    print("KERNEL_OK")
</pallas_src>

<mosaic_0001>
module attributes {stable_mosaic.version = 11 : i64} {
  func.func @_dropout2d_kernel(%arg0: i32, %arg1: i32, %arg2: memref<8x1xf32, #tpu.memory_space<vmem>>, %arg3: memref<8x256xf32, #tpu.memory_space<vmem>>, %arg4: memref<8x256xf32, #tpu.memory_space<vmem>>) attributes {dimension_semantics = [#tpu.dimension_semantics<parallel>, #tpu.dimension_semantics<parallel>], iteration_bounds = array<i64: 1, 1>, scalar_prefetch = 0 : i64, scratch_operands = 0 : i64, tpu.core_type = #tpu.core_type<tc>, window_params = [{transform_indices = @transform_0, window_bounds = array<i64: 8, 1>}, {transform_indices = @transform_1, window_bounds = array<i64: 8, 256>}, {transform_indices = @transform_2, window_bounds = array<i64: 8, 256>}]} {
    %c0 = arith.constant 0 : index
    %c0_0 = arith.constant 0 : index
    %0 = vector.load %arg3[%c0, %c0_0] : memref<8x256xf32, #tpu.memory_space<vmem>>, vector<8x256xf32>
    %c0_1 = arith.constant 0 : index
    %c0_2 = arith.constant 0 : index
    %1 = vector.load %arg2[%c0_1, %c0_2] : memref<8x1xf32, #tpu.memory_space<vmem>>, vector<8x1xf32>
    %2 = vector.broadcast %1 : vector<8x1xf32> to vector<8x256xf32>
    %3 = arith.mulf %0, %2 : vector<8x256xf32>
    %c0_3 = arith.constant 0 : index
    %c0_4 = arith.constant 0 : index
    %4 = vector.load %arg4[%c0_3, %c0_4] : memref<8x256xf32, #tpu.memory_space<vmem>>, vector<8x256xf32>
    tpu.vector_store %arg4[%c0_3, %c0_4], %3 {strides = array<i32>} : memref<8x256xf32, #tpu.memory_space<vmem>>, vector<8x256xf32>,
    return
  }
  func.func @transform_0(%arg0: i32, %arg1: i32) -> (i32, i32) {
    %c0_i32 = arith.constant 0 : i32
    %c0_i32_0 = arith.constant 0 : i32
    return %arg0, %c0_i32 : i32, i32
  }
  func.func @transform_1(%arg0: i32, %arg1: i32) -> (i32, i32) {
    %c0_i32 = arith.constant 0 : i32
    return %arg0, %arg1 : i32, i32
  }
  func.func @transform_2(%arg0: i32, %arg1: i32) -> (i32, i32) {
    %c0_i32 = arith.constant 0 : i32
    return %arg0, %arg1 : i32, i32
  }
}

</mosaic_0001>

<llo_original>
// kernel: tpu_custom_call.1
$region0: #{tpu_custom_call.1}
  #allocation0 [shape = 'u32[]', space=smem, size = 0x4, offset = 0x4, fixed_abs, tag = 'smem constant byte address 0x4 - core index']
  #allocation1 [shape = 'u32[144,128]{1,0:T(1,128)}', space=vmem, size = 0x12000, scoped, tag = 'internal scratch']
  %s0 = inlined_call_operand.vmem [shape: f32[8,1], index: 0, kind: input, shape index: {}]
  %s1 = inlined_call_operand.hbm [shape: f32[8,256], index: 1, kind: input, shape index: {}]
  %s2 = inlined_call_operand.hbm [shape: f32[8,256], index: 2, kind: output, shape index: {}]
  %s3 = sld [smem:[#allocation0]]
  $region22: #{tpu_custom_call.1} parent=0
    _
  %s5 = ssub.s32 1, %s3
  %s6 = scalar_select 0, %s5, %s3
  $region1: #{tpu_custom_call.1} parent=0
    #allocation2 [shape = 'u8[8192]{0}', space=vmem, size = 0x2000, scoped, tag = 'input window, operand 1, single buffered']
    #allocation3 [shape = 's32[1]{0}', space=sflag, size = 0x4, scoped, tag = 'scoped memory for tpu_custom_call.1']
    #allocation4 [shape = 's32[1]{0}', space=sflag, size = 0x4, scoped, tag = 'scoped memory for tpu_custom_call.1']
    #allocation5 [shape = 'u8[8192]{0}', space=vmem, size = 0x2000, scoped, tag = 'output window, operand 0, single buffered']
    %7 = vsyncpa [#allocation3], 0
    %8 = vsyncpa [#allocation4], 0
    // Predicated region
    $region2: #{tpu_custom_call.1} parent=1 // pred_check
      _
    $region3: #{tpu_custom_call.1} parent=1 // pred_check_branch
      %10 = sbr.rel (0) target = $region5
    $region4: #{tpu_custom_call.1} parent=1 // pred_region
      _
    $region5: #{tpu_custom_call.1} parent=1 // pred_fallthru
      _
    // Predicated region
    $region6: #{tpu_custom_call.1} parent=1 // pred_check
      _
    $region7: #{tpu_custom_call.1} parent=1 // pred_check_branch
      %12 = sbr.rel (0) target = $region9
    $region8: #{tpu_custom_call.1} parent=1 // pred_region
      %s14 = ssub.s32 256, 256
      %15 = vsyncadd [#allocation3], %s14
      %s17 = sshll.u32 [#allocation2], 4
      %s18 = int_to_ptr.vmem [resolvable:$true] %s17
      %20 = dma.hbm_to_vmem [thread:$0]  %s1, 256, %s18, [#allocation3]
    $region9: #{tpu_custom_call.1} parent=1 // pred_fallthru
      _
    // Predicated region
    $region10: #{tpu_custom_call.1} parent=1 // pred_check
      _
    $region11: #{tpu_custom_call.1} parent=1 // pred_check_branch
      %22 = sbr.rel (0) target = $region13
    $region12: #{tpu_custom_call.1} parent=1 // pred_region
      %23 = dma.done [#allocation3], 256
    $region13: #{tpu_custom_call.1} parent=1 // pred_fallthru
      _
    %v24 = vld [vmem:[#allocation2] sm:$0xff]
    %v25 = vld [vmem:[#allocation2 + $0x8] sm:$0xff]
    %v26 = vld [vmem:[%s0] sm:$0xff]
    %28 = vset.pattern.permute.xlu0 0
    %29 = vperm.xlu0 %28, %v26
    %v30 = vpop.permute.xlu0 %29
    %v32 = vmul.f32 %v24, %v30
    %v33 = vmul.f32 %v25, %v30
    %34 = vst [vmem:[#allocation5] sm:$0xff] %v32
    %35 = vst [vmem:[#allocation5 + $0x8] sm:$0xff] %v33
    // Predicated region
    $region14: #{tpu_custom_call.1} parent=1 // pred_check
      _
    $region15: #{tpu_custom_call.1} parent=1 // pred_check_branch
      %37 = sbr.rel (0) target = $region17
    $region16: #{tpu_custom_call.1} parent=1 // pred_region
      %s39 = ssub.s32 256, 256
      %40 = vsyncadd [#allocation4], %s39
      %s42 = sshll.u32 [#allocation5], 4
      %s43 = int_to_ptr.vmem [resolvable:$true] %s42
      %45 = dma.vmem_to_hbm [thread:$0]  %s43, 256, %s2, [#allocation4]
    $region17: #{tpu_custom_call.1} parent=1 // pred_fallthru
      _
    // Predicated region
    $region18: #{tpu_custom_call.1} parent=1 // pred_check
      _
    $region19: #{tpu_custom_call.1} parent=1 // pred_check_branch
      %47 = sbr.rel (0) target = $region21
    $region20: #{tpu_custom_call.1} parent=1 // pred_region
      %48 = dma.done [#allocation4], 256
    $region21: #{tpu_custom_call.1} parent=1 // pred_fallthru
      _
    %49 = vsyncpa [#allocation3], 1
    %50 = vsyncpa [#allocation4], 1

</llo_original>
